<compile_context>
chip_gen: v7x
topology: tpu7x:2x2x1
jax: 0.10.0
libtpu: 0.0.40
codegen_flags: <defaults>
</compile_context>

<pallas_src>
import functools

import jax
import jax.numpy as jnp
from jax.experimental import pallas as pl
from jax.experimental.pallas import tpu as pltpu

_LANE = 128  # vreg lane width


def _hswish_kernel(x_ref, o_ref):
    x = x_ref[...]
    # relu6(x + 3) = clamp(x + 3, 0, 6); pure VPU elementwise in x's dtype.
    # True division by 6 (matches torch's `/ 6`), not a reciprocal multiply.
    o_ref[...] = x * jnp.clip(x + 3.0, 0.0, 6.0) / 6.0


def _round_up(a, b):
    return (a + b - 1) // b * b


def _default_block_bytes():
    # v7x (3.2 TB/s HBM, 64 MiB VMEM/TC) benefits from 8 MiB blocks; v5e/v6e
    # are already at the roofline knee by 4 MiB.  Fall back to 4 MiB if the
    # hardware query is unavailable.
    try:
        info = pltpu.get_tpu_info()
        vmem = getattr(info, "vmem_capacity_bytes", None)
        if vmem is not None and vmem <= (64 << 20):  # v7x-class TensorCore
            return 8 << 20
    except Exception:
        pass
    return 4 << 20


@functools.partial(jax.jit, static_argnames=("target_block_bytes",))
def hswish(x, *, target_block_bytes=None):
    """Elementwise HSwish matching torch: x * relu6(x + 3) / 6."""
    orig_shape = x.shape
    dtype = x.dtype
    n = x.size
    if n == 0:
        return x

    itemsize = dtype.itemsize
    if n % _LANE == 0:
        rows, cols = n // _LANE, _LANE                    # lane-dense fast path
    else:
        cols = orig_shape[-1] if x.ndim >= 1 else 1        # keep last dim whole
        rows = n // cols
    x2d = x.reshape(rows, cols)   # metadata-only for contiguous row-major input

    if target_block_bytes is None:
        target_block_bytes = _default_block_bytes()

    sub = max(8, 32 // itemsize)                  # sublane multiple (f32:8 bf16:16 i8:32)
    vmem_row_bytes = _round_up(cols, _LANE) * itemsize    # lane-padded VMEM width
    blk_rows = max(sub, target_block_bytes // vmem_row_bytes // sub * sub)

    # Pipeline guard: keep >= 4 blocks in flight once the slab is past ~1 MiB
    # so the double-buffer pipeline (and both TCs on v7x) stay busy.
    if rows * vmem_row_bytes > (1 << 20):
        quarter = _round_up(pl.cdiv(rows, 4), sub)
        blk_rows = min(blk_rows, max(sub, quarter))
    blk_rows = min(blk_rows, _round_up(rows, sub))        # don't exceed the data

    grid = (pl.cdiv(rows, blk_rows),)                     # partial tail block is masked

    block_vmem = blk_rows * vmem_row_bytes
    # in + out, double-buffered, plus headroom; clamp to a range that is safe
    # on all generations (v5e/v6e: 128 MiB physical, v7x: 64 MiB physical).
    vmem_limit = min(48 << 20, max(32 << 20, 4 * block_vmem + (8 << 20)))

    cost = pl.CostEstimate(
        flops=5 * n,                      # add, max, min, mul, div per element
        transcendentals=0,
        bytes_accessed=2 * n * itemsize,
    )

    out2d = pl.pallas_call(
        _hswish_kernel,
        out_shape=jax.ShapeDtypeStruct((rows, cols), dtype),
        grid_spec=pltpu.PrefetchScalarGridSpec(
            num_scalar_prefetch=0,
            grid=grid,
            in_specs=[pl.BlockSpec((blk_rows, cols), lambda i: (i, 0))],
            out_specs=pl.BlockSpec((blk_rows, cols), lambda i: (i, 0)),
        ),
        compiler_params=pltpu.CompilerParams(
            dimension_semantics=("parallel",),
            vmem_limit_bytes=vmem_limit,
        ),
        cost_estimate=cost,
        # TODO(synk): torch's inplace=True has no functional equivalent; pass
        # input_output_aliases={0: 0} here only when the caller donates x.
    )(x2d)

    return out2d.reshape(orig_shape)


def hswish_ref(x):
    return x * jnp.clip(x + 3.0, 0.0, 6.0) / 6.0


if __name__ == "__main__":
    key = jax.random.PRNGKey(0)

    # NCHW input like the PyTorch module: batch=2, channels=4, spatial=16x16.
    x = jax.random.normal(key, (2, 4, 16, 16), dtype=jnp.float32) * 3.0
    out = hswish(x)
    jax.block_until_ready(out)
    assert out.shape == x.shape and out.dtype == x.dtype
    assert jnp.allclose(out, hswish_ref(x), atol=1e-6, rtol=1e-6)

    # Ragged size (n % 128 != 0): exercises the zero-copy masked-tail path.
    x2 = jax.random.normal(jax.random.PRNGKey(1), (3, 5, 37, 41),
                           dtype=jnp.float32) * 3.0
    out2 = hswish(x2)
    jax.block_until_ready(out2)
    assert out2.shape == x2.shape and out2.dtype == x2.dtype
    assert jnp.allclose(out2, hswish_ref(x2), atol=1e-6, rtol=1e-6)

    # >1 MiB slab: exercises the multi-block (grid >= 4) pipelined path.
    x3 = jax.random.normal(jax.random.PRNGKey(2), (4, 32, 56, 56),
                           dtype=jnp.float32) * 3.0
    out3 = hswish(x3)
    jax.block_until_ready(out3)
    assert jnp.allclose(out3, hswish_ref(x3), atol=1e-5, rtol=1e-6)

    # bf16 path (16-sublane blocks, half the DMA bytes).
    x4 = (jax.random.normal(jax.random.PRNGKey(3), (2, 4, 16, 16),
                            dtype=jnp.float32) * 3.0).astype(jnp.bfloat16)
    out4 = hswish(x4)
    jax.block_until_ready(out4)
    assert out4.dtype == x4.dtype
    assert jnp.allclose(out4.astype(jnp.float32),
                        hswish_ref(x4).astype(jnp.float32),
                        atol=0.1, rtol=0.02)

    print("KERNEL_OK")
</pallas_src>

<mosaic_0001>
module attributes {stable_mosaic.version = 11 : i64} {
  func.func @_hswish_kernel(%arg0: i32, %arg1: memref<16x128xf32, #tpu.memory_space<vmem>>, %arg2: memref<16x128xf32, #tpu.memory_space<vmem>>) attributes {dimension_semantics = [#tpu.dimension_semantics<parallel>], iteration_bounds = array<i64: 1>, scalar_prefetch = 0 : i64, scratch_operands = 0 : i64, tpu.core_type = #tpu.core_type<tc>, window_params = [{transform_indices = @transform_0, window_bounds = array<i64: 16, 128>}, {transform_indices = @transform_1, window_bounds = array<i64: 16, 128>}]} {
    %c0 = arith.constant 0 : index
    %c0_0 = arith.constant 0 : index
    %0 = vector.load %arg1[%c0, %c0_0] : memref<16x128xf32, #tpu.memory_space<vmem>>, vector<16x128xf32>
    %cst = arith.constant 3.000000e+00 : f32
    %1 = vector.broadcast %cst : f32 to vector<16x128xf32>
    %2 = arith.addf %0, %1 : vector<16x128xf32>
    %cst_1 = arith.constant 0.000000e+00 : f32
    %cst_2 = arith.constant 6.000000e+00 : f32
    %3 = vector.broadcast %cst_1 : f32 to vector<16x128xf32>
    %4 = arith.maximumf %3, %2 : vector<16x128xf32>
    %5 = vector.broadcast %cst_2 : f32 to vector<16x128xf32>
    %6 = arith.minimumf %5, %4 : vector<16x128xf32>
    %7 = arith.mulf %0, %6 : vector<16x128xf32>
    %cst_3 = arith.constant 6.000000e+00 : f32
    %8 = vector.broadcast %cst_3 : f32 to vector<16x128xf32>
    %9 = arith.divf %7, %8 : vector<16x128xf32>
    %c0_4 = arith.constant 0 : index
    %c0_5 = arith.constant 0 : index
    %10 = vector.load %arg2[%c0_4, %c0_5] : memref<16x128xf32, #tpu.memory_space<vmem>>, vector<16x128xf32>
    tpu.vector_store %arg2[%c0_4, %c0_5], %9 {strides = array<i32>} : memref<16x128xf32, #tpu.memory_space<vmem>>, vector<16x128xf32>,
    return
  }
  func.func @transform_0(%arg0: i32) -> (i32, i32) {
    %c0_i32 = arith.constant 0 : i32
    %c0_i32_0 = arith.constant 0 : i32
    return %arg0, %c0_i32 : i32, i32
  }
  func.func @transform_1(%arg0: i32) -> (i32, i32) {
    %c0_i32 = arith.constant 0 : i32
    %c0_i32_0 = arith.constant 0 : i32
    return %arg0, %c0_i32 : i32, i32
  }
}

</mosaic_0001>

<llo_original>
// kernel: hswish.1
$region0: #{hswish.1}
  #allocation0 [shape = 'u32[]', space=smem, size = 0x4, offset = 0x4, fixed_abs, tag = 'smem constant byte address 0x4 - core index']
  #allocation1 [shape = 'u32[144,128]{1,0:T(1,128)}', space=vmem, size = 0x12000, scoped, tag = 'internal scratch']
  %s0 = inlined_call_operand.vmem [shape: f32[16,128], index: 0, kind: input, shape index: {}]
  %s1 = inlined_call_operand.vmem [shape: f32[16,128], index: 1, kind: output, shape index: {}]
  %s2 = sld [smem:[#allocation0]]
  $region14: #{hswish.1} parent=0
    _
  %s4 = ssub.s32 1, %s2
  %s5 = scalar_select 0, %s4, %s2
  // Predicated region
  $region2: #{hswish.1} parent=0 // pred_check
    _
  $region3: #{hswish.1} parent=0 // pred_check_branch
    %7 = sbr.rel (0) target = $region5
  $region4: #{hswish.1} parent=0 // pred_region
    _
  $region5: #{hswish.1} parent=0 // pred_fallthru
    _
  %v8 = vld [vmem:[%s0] sm:$0xff]
  %v9 = vld [vmem:[%s0 + $0x8] sm:$0xff]
  %v10 = vadd.f32 %v8, 3.0
  %v11 = vadd.f32 %v9, 3.0
  %v12 = vmax.f32 %v10, 0.0
  %v13 = vmax.f32 %v11, 0.0
  %v14 = vmin.f32 %v12, 6.0
  %v15 = vmin.f32 %v13, 6.0
  %v16 = vmul.f32 %v8, %v14
  %v17 = vmul.f32 %v9, %v15
  %v18 = vrcp.pop 6.0
  %v19 = vmul.f32 %v16, %v18
  %v20 = vmul.f32 %v17, %v18
  %21 = vst [vmem:[%s1] sm:$0xff] %v19
  %22 = vst [vmem:[%s1 + $0x8] sm:$0xff] %v20
  // Predicated region
  $region6: #{hswish.1} parent=0 // pred_check
    _
  $region7: #{hswish.1} parent=0 // pred_check_branch
    %24 = sbr.rel (0) target = $region9
  $region8: #{hswish.1} parent=0 // pred_region
    _
  $region9: #{hswish.1} parent=0 // pred_fallthru
    _
  // Predicated region
  $region10: #{hswish.1} parent=0 // pred_check
    _
  $region11: #{hswish.1} parent=0 // pred_check_branch
    %26 = sbr.rel (0) target = $region13
  $region12: #{hswish.1} parent=0 // pred_region
    _
  $region13: #{hswish.1} parent=0 // pred_fallthru
    _

</llo_original>
